<compile_context>
chip_gen: v7x
topology: tpu7x:2x2x1
jax: 0.10.0
libtpu: 0.0.40
codegen_flags: <defaults>
</compile_context>

<pallas_src>
import functools

import jax
import jax.numpy as jnp
from jax.experimental import pallas as pl
from jax.experimental.pallas import tpu as pltpu


def _ln_affine_kernel(x_ref, g_ref, b_ref, o_ref, *, eps, n_elems):
    # x_ref block: (TB, R, L) -- TB whole (zero-padded) samples per grid step.
    # Pass 1: per-sample sum and sum-of-squares.  Reduce the sublane axis (R)
    # first (cheap VPU vreg adds), leaving one cross-lane XLU reduce per sample.
    xf = x_ref[...].astype(jnp.float32)
    s = jnp.sum(jnp.sum(xf, axis=1, keepdims=True), axis=2, keepdims=True)        # (TB,1,1)
    sq = jnp.sum(jnp.sum(xf * xf, axis=1, keepdims=True), axis=2, keepdims=True)  # (TB,1,1)

    mean = s * (1.0 / n_elems)
    # torch.Tensor.std default is unbiased (ddof=1); single-pass form in f32.
    var = (sq - n_elems * mean * mean) * (1.0 / (n_elems - 1.0))
    var = jnp.maximum(var, 0.0)  # guard tiny negative from cancellation
    # eps is added to std (outside the sqrt), matching the PyTorch module.
    inv = 1.0 / (jnp.sqrt(var) + eps)  # per-sample scalars; negligible cost

    g = g_ref[...].astype(jnp.float32)[None, :, :]  # (1, R, L)
    b = b_ref[...].astype(jnp.float32)[None, :, :]  # (1, R, L)

    # Pass 2: re-read + re-cast the input (no block-sized f32 live range
    # spanning the reduction), normalize + affine as cheap VPU FMAs.
    xn = (x_ref[...].astype(jnp.float32) - mean) * inv
    o_ref[...] = (xn * g + b).astype(o_ref.dtype)


def _ln_plain_kernel(x_ref, o_ref, *, eps, n_elems):
    # affine=False fast path: no gamma/beta inputs, no FMA.
    xf = x_ref[...].astype(jnp.float32)
    s = jnp.sum(jnp.sum(xf, axis=1, keepdims=True), axis=2, keepdims=True)
    sq = jnp.sum(jnp.sum(xf * xf, axis=1, keepdims=True), axis=2, keepdims=True)

    mean = s * (1.0 / n_elems)
    var = (sq - n_elems * mean * mean) * (1.0 / (n_elems - 1.0))
    var = jnp.maximum(var, 0.0)
    inv = 1.0 / (jnp.sqrt(var) + eps)

    o_ref[...] = ((x_ref[...].astype(jnp.float32) - mean) * inv).astype(o_ref.dtype)


def _choose_batch_tile(n, sample_bytes, target_bytes, min_steps=4):
    """Pick samples-per-block so each block is ~target_bytes while keeping at
    least min(min_steps, n) grid steps (megacore sharding + pipeline depth).
    TB need not divide n; the caller pads the ragged tail."""
    cap_bytes = max(1, target_bytes // max(1, sample_bytes))
    steps_wanted = max(1, min(min_steps, n))
    cap_steps = -(-n // steps_wanted)  # ceil(n / steps_wanted)
    return max(1, min(int(cap_bytes), int(cap_steps)))


def layer_norm(x, gamma=None, beta=None, *, eps=1e-5, affine=True):
    """LayerNorm matching the PyTorch module's forward.

    x: (N, C, H, W); gamma, beta: (C,) when affine=True.
    """
    N, C, H, W = x.shape
    HW = H * W
    total = C * HW
    assert total > 1, "unbiased std needs more than one element per sample"

    # Lane/sublane-dense flattened layout: pad each sample to a multiple of
    # 128 lanes and at least 8 sublanes.  Zeros don't perturb sum / sumsq;
    # statistics use n_elems = true count; padding is sliced off afterwards.
    total_padded = max(-(-total // 128) * 128, 8 * 128)
    R, L = total_padded // 128, 128
    pad = total_padded - total

    x_flat = x.reshape(N, total)
    if pad:
        x_flat = jnp.pad(x_flat, ((0, 0), (0, pad)))

    # Chip-aware block sizing / VMEM budget.
    try:
        vmem_cap = int(pltpu.get_tpu_info().vmem_capacity_bytes)
    except Exception:  # pragma: no cover - defensive fallback
        vmem_cap = 64 << 20
    target_bytes = (6 << 20) if vmem_cap >= (100 << 20) else (2 << 20)

    itemsize = x.dtype.itemsize
    sample_bytes = total_padded * itemsize
    TB = _choose_batch_tile(N, sample_bytes, target_bytes=target_bytes)
    n_steps = -(-N // TB)
    N_padded = n_steps * TB
    if N_padded != N:
        x_flat = jnp.pad(x_flat, ((0, N_padded - N), (0, 0)))
    x2 = x_flat.reshape(N_padded, R, L)

    block_elems = TB * R * L
    est = (4 * block_elems * itemsize          # double-buffered in + out blocks
           + 2 * block_elems * 4               # f32 temporaries in the body
           + (4 * R * L * itemsize if affine else 0)  # gamma/beta buffers
           + (2 << 20))                        # headroom
    vmem_limit = int(min(int(vmem_cap * 3 // 4), max(16 << 20, est)))

    grid = (n_steps,)
    compiler_params = pltpu.CompilerParams(
        dimension_semantics=("parallel",),
        vmem_limit_bytes=vmem_limit,
    )
    x_spec = pl.BlockSpec((TB, R, L), lambda i: (i, 0, 0))
    out_spec = pl.BlockSpec((TB, R, L), lambda i: (i, 0, 0))
    out_shape = jax.ShapeDtypeStruct((N_padded, R, L), x.dtype)

    if affine:
        # Per-channel params broadcast once to the padded flat layout, kept in
        # x.dtype (halves HBM/VMEM for bf16); fetched once (constant block).
        g_flat = jnp.broadcast_to(
            gamma.astype(x.dtype).reshape(C, 1), (C, HW)).reshape(total)
        b_flat = jnp.broadcast_to(
            beta.astype(x.dtype).reshape(C, 1), (C, HW)).reshape(total)
        if pad:
            g_flat = jnp.pad(g_flat, (0, pad))
            b_flat = jnp.pad(b_flat, (0, pad))
        g2 = g_flat.reshape(R, L)
        b2 = b_flat.reshape(R, L)

        kernel = functools.partial(
            _ln_affine_kernel, eps=float(eps), n_elems=float(total))
        out = pl.pallas_call(
            kernel,
            out_shape=out_shape,
            grid_spec=pltpu.PrefetchScalarGridSpec(
                num_scalar_prefetch=0,
                grid=grid,
                in_specs=[
                    x_spec,
                    pl.BlockSpec((R, L), lambda i: (0, 0)),
                    pl.BlockSpec((R, L), lambda i: (0, 0)),
                ],
                out_specs=out_spec,
            ),
            compiler_params=compiler_params,
        )(x2, g2, b2)
    else:
        kernel = functools.partial(
            _ln_plain_kernel, eps=float(eps), n_elems=float(total))
        out = pl.pallas_call(
            kernel,
            out_shape=out_shape,
            grid_spec=pltpu.PrefetchScalarGridSpec(
                num_scalar_prefetch=0,
                grid=grid,
                in_specs=[x_spec],
                out_specs=out_spec,
            ),
            compiler_params=compiler_params,
        )(x2)

    out = out.reshape(N_padded, total_padded)[:N, :total]
    return out.reshape(N, C, H, W)


if __name__ == "__main__":
    key = jax.random.PRNGKey(0)
    kx, kg = jax.random.split(key)

    N, C, H, W = 2, 4, 16, 16
    x = jax.random.normal(kx, (N, C, H, W), dtype=jnp.float32)

    # Deterministic "parameters": gamma ~ U[0,1) (like torch .uniform_()),
    # beta = zeros -- seeded, synthetic init.
    gamma = jax.random.uniform(kg, (C,), dtype=jnp.float32)
    beta = jnp.zeros((C,), dtype=jnp.float32)

    out = layer_norm(x, gamma, beta, eps=1e-5, affine=True)
    out = jax.block_until_ready(out)

    # Reference in plain JAX (same math as the PyTorch module).
    xf = x.reshape(N, -1)
    mean = xf.mean(axis=1).reshape(N, 1, 1, 1)
    std = jnp.sqrt(
        ((xf - xf.mean(axis=1, keepdims=True)) ** 2).sum(axis=1)
        / (xf.shape[1] - 1)
    ).reshape(N, 1, 1, 1)
    ref = (x - mean) / (std + 1e-5)
    ref = ref * gamma.reshape(1, C, 1, 1) + beta.reshape(1, C, 1, 1)
    assert jnp.allclose(out, ref, atol=5e-5, rtol=5e-5), "affine mismatch"

    # Also exercise the affine=False fast path.
    out2 = jax.block_until_ready(layer_norm(x, eps=1e-5, affine=False))
    ref2 = (x - mean) / (std + 1e-5)
    assert jnp.allclose(out2, ref2, atol=5e-5, rtol=5e-5), "plain mismatch"

    print("KERNEL_OK")
</pallas_src>

<mosaic_0001>
module attributes {stable_mosaic.version = 11 : i64} {
  func.func @_ln_affine_kernel(%arg0: i32, %arg1: memref<1x8x128xf32, #tpu.memory_space<vmem>>, %arg2: memref<8x128xf32, #tpu.memory_space<vmem>>, %arg3: memref<8x128xf32, #tpu.memory_space<vmem>>, %arg4: memref<1x8x128xf32, #tpu.memory_space<vmem>>) attributes {dimension_semantics = [#tpu.dimension_semantics<parallel>], iteration_bounds = array<i64: 2>, scalar_prefetch = 0 : i64, scratch_operands = 0 : i64, tpu.core_type = #tpu.core_type<tc>, window_params = [{transform_indices = @transform_0, window_bounds = array<i64: 1, 8, 128>}, {pipeline_mode = #tpu.pipeline_mode<synchronous>, transform_indices = @transform_1, window_bounds = array<i64: 8, 128>}, {pipeline_mode = #tpu.pipeline_mode<synchronous>, transform_indices = @transform_2, window_bounds = array<i64: 8, 128>}, {transform_indices = @transform_3, window_bounds = array<i64: 1, 8, 128>}]} {
    %c0 = arith.constant 0 : index
    %c0_0 = arith.constant 0 : index
    %c0_1 = arith.constant 0 : index
    %0 = vector.load %arg1[%c0, %c0_0, %c0_1] : memref<1x8x128xf32, #tpu.memory_space<vmem>>, vector<1x8x128xf32>
    %cst = arith.constant dense<0.000000e+00> : vector<1x128xf32>
    %1 = vector.multi_reduction <add>, %0, %cst [1] : vector<1x8x128xf32> to vector<1x128xf32>
    %2 = vector.shape_cast %1 : vector<1x128xf32> to vector<1x1x128xf32>
    %cst_2 = arith.constant dense<0.000000e+00> : vector<1x1xf32>
    %3 = vector.multi_reduction <add>, %2, %cst_2 [2] : vector<1x1x128xf32> to vector<1x1xf32>
    %4 = vector.shape_cast %3 : vector<1x1xf32> to vector<1x1x1xf32>
    %5 = arith.mulf %0, %0 : vector<1x8x128xf32>
    %cst_3 = arith.constant dense<0.000000e+00> : vector<1x128xf32>
    %6 = vector.multi_reduction <add>, %5, %cst_3 [1] : vector<1x8x128xf32> to vector<1x128xf32>
    %7 = vector.shape_cast %6 : vector<1x128xf32> to vector<1x1x128xf32>
    %cst_4 = arith.constant dense<0.000000e+00> : vector<1x1xf32>
    %8 = vector.multi_reduction <add>, %7, %cst_4 [2] : vector<1x1x128xf32> to vector<1x1xf32>
    %9 = vector.shape_cast %8 : vector<1x1xf32> to vector<1x1x1xf32>
    %cst_5 = arith.constant 9.765625E-4 : f32
    %10 = vector.broadcast %cst_5 : f32 to vector<1x1x1xf32>
    %11 = arith.mulf %4, %10 : vector<1x1x1xf32>
    %cst_6 = arith.constant 1.024000e+03 : f32
    %12 = vector.broadcast %cst_6 : f32 to vector<1x1x1xf32>
    %13 = arith.mulf %12, %11 : vector<1x1x1xf32>
    %14 = arith.mulf %13, %11 : vector<1x1x1xf32>
    %15 = arith.subf %9, %14 : vector<1x1x1xf32>
    %cst_7 = arith.constant 9.77517105E-4 : f32
    %16 = vector.broadcast %cst_7 : f32 to vector<1x1x1xf32>
    %17 = arith.mulf %15, %16 : vector<1x1x1xf32>
    %cst_8 = arith.constant 0.000000e+00 : f32
    %18 = vector.broadcast %cst_8 : f32 to vector<1x1x1xf32>
    %19 = arith.maximumf %17, %18 : vector<1x1x1xf32>
    %20 = math.sqrt %19 : vector<1x1x1xf32>
    %cst_9 = arith.constant 9.99999974E-6 : f32
    %21 = vector.broadcast %cst_9 : f32 to vector<1x1x1xf32>
    %22 = arith.addf %20, %21 : vector<1x1x1xf32>
    %cst_10 = arith.constant 1.000000e+00 : f32
    %23 = vector.broadcast %cst_10 : f32 to vector<1x1x1xf32>
    %24 = arith.divf %23, %22 : vector<1x1x1xf32>
    %c0_11 = arith.constant 0 : index
    %c0_12 = arith.constant 0 : index
    %25 = vector.load %arg2[%c0_11, %c0_12] : memref<8x128xf32, #tpu.memory_space<vmem>>, vector<8x128xf32>
    %26 = vector.shape_cast %25 : vector<8x128xf32> to vector<1x8x128xf32>
    %c0_13 = arith.constant 0 : index
    %c0_14 = arith.constant 0 : index
    %27 = vector.load %arg3[%c0_13, %c0_14] : memref<8x128xf32, #tpu.memory_space<vmem>>, vector<8x128xf32>
    %28 = vector.shape_cast %27 : vector<8x128xf32> to vector<1x8x128xf32>
    %c0_15 = arith.constant 0 : index
    %c0_16 = arith.constant 0 : index
    %c0_17 = arith.constant 0 : index
    %29 = vector.load %arg1[%c0_15, %c0_16, %c0_17] : memref<1x8x128xf32, #tpu.memory_space<vmem>>, vector<1x8x128xf32>
    %30 = vector.broadcast %11 : vector<1x1x1xf32> to vector<1x8x128xf32>
    %31 = arith.subf %29, %30 : vector<1x8x128xf32>
    %32 = vector.broadcast %24 : vector<1x1x1xf32> to vector<1x8x128xf32>
    %33 = arith.mulf %31, %32 : vector<1x8x128xf32>
    %34 = arith.mulf %33, %26 : vector<1x8x128xf32>
    %35 = arith.addf %34, %28 : vector<1x8x128xf32>
    %c0_18 = arith.constant 0 : index
    %c0_19 = arith.constant 0 : index
    %c0_20 = arith.constant 0 : index
    %36 = vector.load %arg4[%c0_18, %c0_19, %c0_20] : memref<1x8x128xf32, #tpu.memory_space<vmem>>, vector<1x8x128xf32>
    tpu.vector_store %arg4[%c0_18, %c0_19, %c0_20], %35 {strides = array<i32>} : memref<1x8x128xf32, #tpu.memory_space<vmem>>, vector<1x8x128xf32>,
    return
  }
  func.func @transform_0(%arg0: i32) -> (i32, i32, i32) {
    %c0_i32 = arith.constant 0 : i32
    %c0_i32_0 = arith.constant 0 : i32
    %c0_i32_1 = arith.constant 0 : i32
    return %arg0, %c0_i32, %c0_i32_0 : i32, i32, i32
  }
  func.func @transform_1(%arg0: i32) -> (i32, i32) {
    %c0_i32 = arith.constant 0 : i32
    %c0_i32_0 = arith.constant 0 : i32
    %c0_i32_1 = arith.constant 0 : i32
    return %c0_i32, %c0_i32_0 : i32, i32
  }
  func.func @transform_2(%arg0: i32) -> (i32, i32) {
    %c0_i32 = arith.constant 0 : i32
    %c0_i32_0 = arith.constant 0 : i32
    %c0_i32_1 = arith.constant 0 : i32
    return %c0_i32, %c0_i32_0 : i32, i32
  }
  func.func @transform_3(%arg0: i32) -> (i32, i32, i32) {
    %c0_i32 = arith.constant 0 : i32
    %c0_i32_0 = arith.constant 0 : i32
    %c0_i32_1 = arith.constant 0 : i32
    return %arg0, %c0_i32, %c0_i32_0 : i32, i32, i32
  }
}

</mosaic_0001>

<llo_original>
// kernel: tpu_custom_call.1
$region0: #{tpu_custom_call.1}
  #allocation0 [shape = 'u32[]', space=smem, size = 0x4, offset = 0x4, fixed_abs, tag = 'smem constant byte address 0x4 - core index']
  #allocation1 [shape = 'u32[144,128]{1,0:T(1,128)}', space=vmem, size = 0x12000, scoped, tag = 'internal scratch']
  %s0 = inlined_call_operand.hbm [shape: f32[2,8,128], index: 0, kind: input, shape index: {}]
  %s1 = inlined_call_operand.hbm [shape: f32[8,128], index: 1, kind: input, shape index: {}]
  %s2 = inlined_call_operand.hbm [shape: f32[8,128], index: 2, kind: input, shape index: {}]
  %s3 = inlined_call_operand.hbm [shape: f32[2,8,128], index: 3, kind: output, shape index: {}]
  %s4 = sld [smem:[#allocation0]]
  $region57: #{tpu_custom_call.1} parent=0
    _
  %s6 = ssub.s32 1, %s4
  %s7 = scalar_select 0, %s6, %s4
  $region1: #{tpu_custom_call.1} parent=0
    #allocation2 [shape = 'u8[8192]{0}', space=vmem, size = 0x2000, scoped, tag = 'input window, operand 0']
    #allocation3 [shape = 's32[2]{0}', space=sflag, size = 0x8, scoped, tag = 'scoped memory for tpu_custom_call.1']
    #allocation4 [shape = 's32[2]{0}', space=sflag, size = 0x8, scoped, tag = 'scoped memory for tpu_custom_call.1']
    #allocation5 [shape = 'u8[4096]{0}', space=vmem, size = 0x1000, scoped, tag = 'input window, operand 1, single buffered']
    #allocation6 [shape = 's32[1]{0}', space=sflag, size = 0x4, scoped, tag = 'scoped memory for tpu_custom_call.1']
    #allocation7 [shape = 'u8[4096]{0}', space=vmem, size = 0x1000, scoped, tag = 'input window, operand 2, single buffered']
    #allocation8 [shape = 'u8[8192]{0}', space=vmem, size = 0x2000, scoped, tag = 'output window, operand 0']
    %8 = vsyncpa [#allocation3], 0
    %s9 = scalar_lea.sflag [#allocation3], 1
    %10 = vsyncpa %s9, 0
    %11 = vsyncpa [#allocation6], 0
    %12 = vsyncpa [#allocation4], 0
    %s13 = scalar_lea.sflag [#allocation4], 1
    %14 = vsyncpa %s13, 0
    loop: start=0, step=1, limit=4
    $region2: #{tpu_custom_call.1} parent=1 // loop_pre_header
      _
    $region3: #{tpu_custom_call.1} parent=1 // loop_header
      %s16 = sphi 0, %s20
      %p17 = scmp.ge.s32.totalorder %s16, 4
      %s26 = sphi 0, %s28
      %s29 = sphi 0, %s26
      %s30 = sphi 0, %s29
      %s46 = sphi 0, %s30
      %s50 = sphi 0, %s50
      %s52 = sphi 0, %s50
      %s53 = sphi 0, %s52
      %s67 = sphi 0, %s53
      %s71 = sphi 0, %s71
      %s73 = sphi 0, %s71
      %s74 = sphi 0, %s73
      %s88 = sphi 0, %s74
      %s94 = sphi 0, %s96
      %s97 = sphi 0, %s94
      %s98 = sphi 0, %s97
      %s114 = sphi 0, %s98
    $region4: #{tpu_custom_call.1} parent=1 // loop_header_branch
      %19 = sbr.rel (%p17) target = $region8
    $region5: #{tpu_custom_call.1} parent=1 // loop_body
      %s21 = ssub.s32 %s16, 1
      %s22 = ssub.s32 %s16, 2
      %s23 = sadd.s32 %s16, 1
      %s24 = ssub.s32 %s16, %s23
      %p25 = scmp.eq.s32.totalorder %s24, 0
      %s27 = sadd.s32 %s26, 1
      %s28 = scalar_select %p25, %s26, %s27
      %p31 = pneg %p25
      %p32 = scmp.eq.s32.totalorder %s16, 1
      %p33 = por %p31, %p32
      %p34 = scmp.ne.s32.totalorder %s26, %s29
      %p35 = scmp.eq.s32.totalorder %s16, 0
      %p36 = por %p34, %p35
      %p37 = scmp.ne.s32.totalorder %s26, %s29
      %p38 = scmp.eq.s32.totalorder %s21, 1
      %p39 = por %p37, %p38
      %p40 = scmp.ne.s32.totalorder %s29, %s30
      %p41 = scmp.eq.s32.totalorder %s21, 0
      %p42 = por %p40, %p41
      %p43 = scmp.ne.s32.totalorder %s29, %s30
      %p44 = scmp.eq.s32.totalorder %s22, 1
      %p45 = por %p43, %p44
      %p47 = scmp.ne.s32.totalorder %s30, %s46
      %p48 = scmp.eq.s32.totalorder %s22, 0
      %p49 = por %p47, %p48
      %s51 = sadd.s32 %s50, 1
      %p54 = scmp.eq.s32.totalorder %s16, 1
      %p55 = scmp.ne.s32.totalorder %s50, %s52
      %p56 = scmp.eq.s32.totalorder %s16, 0
      %p57 = por %p55, %p56
      %p58 = scmp.ne.s32.totalorder %s50, %s52
      %p59 = scmp.eq.s32.totalorder %s21, 1
      %p60 = por %p58, %p59
      %p61 = scmp.ne.s32.totalorder %s52, %s53
      %p62 = scmp.eq.s32.totalorder %s21, 0
      %p63 = por %p61, %p62
      %p64 = scmp.ne.s32.totalorder %s52, %s53
      %p65 = scmp.eq.s32.totalorder %s22, 1
      %p66 = por %p64, %p65
      %p68 = scmp.ne.s32.totalorder %s53, %s67
      %p69 = scmp.eq.s32.totalorder %s22, 0
      %p70 = por %p68, %p69
      %s72 = sadd.s32 %s71, 1
      %p75 = scmp.eq.s32.totalorder %s16, 1
      %p76 = scmp.ne.s32.totalorder %s71, %s73
      %p77 = scmp.eq.s32.totalorder %s16, 0
      %p78 = por %p76, %p77
      %p79 = scmp.ne.s32.totalorder %s71, %s73
      %p80 = scmp.eq.s32.totalorder %s21, 1
      %p81 = por %p79, %p80
      %p82 = scmp.ne.s32.totalorder %s73, %s74
      %p83 = scmp.eq.s32.totalorder %s21, 0
      %p84 = por %p82, %p83
      %p85 = scmp.ne.s32.totalorder %s73, %s74
      %p86 = scmp.eq.s32.totalorder %s22, 1
      %p87 = por %p85, %p86
      %p89 = scmp.ne.s32.totalorder %s74, %s88
      %p90 = scmp.eq.s32.totalorder %s22, 0
      %p91 = por %p89, %p90
      %s92 = ssub.s32 %s16, %s23
      %p93 = scmp.eq.s32.totalorder %s92, 0
      %s95 = sadd.s32 %s94, 1
      %s96 = scalar_select %p93, %s94, %s95
      %p99 = pneg %p93
      %p100 = scmp.eq.s32.totalorder %s16, 1
      %p101 = por %p99, %p100
      %p102 = scmp.ne.s32.totalorder %s94, %s97
      %p103 = scmp.eq.s32.totalorder %s16, 0
      %p104 = por %p102, %p103
      %p105 = scmp.ne.s32.totalorder %s94, %s97
      %p106 = scmp.eq.s32.totalorder %s21, 1
      %p107 = por %p105, %p106
      %p108 = scmp.ne.s32.totalorder %s97, %s98
      %p109 = scmp.eq.s32.totalorder %s21, 0
      %p110 = por %p108, %p109
      %p111 = scmp.ne.s32.totalorder %s97, %s98
      %p112 = scmp.eq.s32.totalorder %s22, 1
      %p113 = por %p111, %p112
      %p115 = scmp.ne.s32.totalorder %s98, %s114
      %p116 = scmp.eq.s32.totalorder %s22, 0
      %p117 = por %p115, %p116
      %p118 = scmp.le.s32.totalorder 1, %s16
      %p119 = scmp.lt.s32.totalorder %s16, 3
      %p120 = pnand %p118, %p119
      %p121 = pneg %p120
      // Predicated region
      $region9: #{tpu_custom_call.1} parent=5 // pred_check
        _
      $region10: #{tpu_custom_call.1} parent=5 // pred_check_branch
        %123 = sbr.rel (%p120) target = $region12
      $region11: #{tpu_custom_call.1} parent=5 // pred_region
        %s124 = ssub.s32 %s16, 1
        // Predicated region
        $region13: #{tpu_custom_call.1} parent=11 // pred_check
          %p125 = pneg %p63
        $region14: #{tpu_custom_call.1} parent=11 // pred_check_branch
          %127 = sbr.rel (%p125) target = $region16
        $region15: #{tpu_custom_call.1} parent=11 // pred_region
          %s129 = ssub.s32 128, 128
          %130 = vsyncadd [#allocation6], %s129
          %s132 = sshll.u32 [#allocation5], 4
          %s133 = int_to_ptr.vmem [resolvable:$true] %s132
          %135 = dma.hbm_to_vmem [thread:$0]  %s1, 128, %s133, [#allocation6]
        $region16: #{tpu_custom_call.1} parent=11 // pred_fallthru
          _
        // Predicated region
        $region17: #{tpu_custom_call.1} parent=11 // pred_check
          %p136 = pneg %p84
        $region18: #{tpu_custom_call.1} parent=11 // pred_check_branch
          %138 = sbr.rel (%p136) target = $region20
        $region19: #{tpu_custom_call.1} parent=11 // pred_region
          %s140 = ssub.s32 128, 128
          %141 = vsyncadd [#allocation6], %s140
          %s143 = sshll.u32 [#allocation7], 4
          %s144 = int_to_ptr.vmem [resolvable:$true] %s143
          %146 = dma.hbm_to_vmem [thread:$0]  %s2, 128, %s144, [#allocation6]
        $region20: #{tpu_custom_call.1} parent=11 // pred_fallthru
          _
      $region12: #{tpu_custom_call.1} parent=5 // pred_fallthru
        _
      %p147 = scmp.lt.s32.totalorder %s16, 2
      // Predicated region
      $region21: #{tpu_custom_call.1} parent=5 // pred_check
        %p148 = pneg %p147
      $region22: #{tpu_custom_call.1} parent=5 // pred_check_branch
        %150 = sbr.rel (%p148) target = $region24
      $region23: #{tpu_custom_call.1} parent=5 // pred_region
        // Predicated region
        $region25: #{tpu_custom_call.1} parent=23 // pred_check
          %p151 = pneg %p36
        $region26: #{tpu_custom_call.1} parent=23 // pred_check_branch
          %153 = sbr.rel (%p151) target = $region28
        $region27: #{tpu_custom_call.1} parent=23 // pred_region
          %s154 = sand.u32 %s26, 1
          %s155 = scalar_lea.sflag [#allocation3], %s154
          %s156 = sand.u32 %s26, 1
          %s157 = smul.addr %s156, 8
          %s158 = scalar_lea.vmem [#allocation2], %s157
          %s160 = ssub.s32 128, 128
          %161 = vsyncadd %s155, %s160
          %s162 = smul.addr %s16, 128
          %s163 = scalar_lea.hbm %s0, %s162
          %s165 = sshll.u32 %s158, 4
          %s166 = int_to_ptr.vmem [resolvable:$true] %s165
          %168 = dma.hbm_to_vmem [thread:$0]  %s163, 128, %s166, %s155
        $region28: #{tpu_custom_call.1} parent=23 // pred_fallthru
          _
      $region24: #{tpu_custom_call.1} parent=5 // pred_fallthru
        _
      %p169 = scmp.le.s32.totalorder 1, %s16
      %p170 = scmp.lt.s32.totalorder %s16, 3
      %p171 = pnand %p169, %p170
      %p172 = pneg %p171
      // Predicated region
      $region29: #{tpu_custom_call.1} parent=5 // pred_check
        _
      $region30: #{tpu_custom_call.1} parent=5 // pred_check_branch
        %174 = sbr.rel (%p171) target = $region32
      $region31: #{tpu_custom_call.1} parent=5 // pred_region
        %s175 = ssub.s32 %s16, 1
        %s176 = sand.u32 %s29, 1
        %s177 = scalar_lea.sflag [#allocation3], %s176
        %s178 = sand.u32 %s29, 1
        %s179 = smul.addr %s178, 8
        %s180 = scalar_lea.vmem [#allocation2], %s179
        // Predicated region
        $region33: #{tpu_custom_call.1} parent=31 // pred_check
          %p181 = pneg %p42
        $region34: #{tpu_custom_call.1} parent=31 // pred_check_branch
          %183 = sbr.rel (%p181) target = $region36
        $region35: #{tpu_custom_call.1} parent=31 // pred_region
          %184 = dma.done %s177, 128
        $region36: #{tpu_custom_call.1} parent=31 // pred_fallthru
          _
        // Predicated region
        $region37: #{tpu_custom_call.1} parent=31 // pred_check
          %p185 = pneg %p63
        $region38: #{tpu_custom_call.1} parent=31 // pred_check_branch
          %187 = sbr.rel (%p185) target = $region40
        $region39: #{tpu_custom_call.1} parent=31 // pred_region
          %188 = dma.done [#allocation6], 128
        $region40: #{tpu_custom_call.1} parent=31 // pred_fallthru
          _
        // Predicated region
        $region41: #{tpu_custom_call.1} parent=31 // pred_check
          %p189 = pneg %p84
        $region42: #{tpu_custom_call.1} parent=31 // pred_check_branch
          %191 = sbr.rel (%p189) target = $region44
        $region43: #{tpu_custom_call.1} parent=31 // pred_region
          %192 = dma.done [#allocation6], 128
        $region44: #{tpu_custom_call.1} parent=31 // pred_fallthru
          _
        %s193 = sand.u32 %s29, 1
        %s194 = scalar_lea.sflag [#allocation3], %s193
        %s195 = sand.u32 %s29, 1
        %s196 = smul.addr %s195, 8
        %s197 = scalar_lea.vmem [#allocation2], %s196
        %p198 = pneg %p42
        %p199 = pneg %p39
        %p200 = pneg %p63
        %p201 = pneg %p60
        %p202 = pneg %p84
        %p203 = pneg %p81
        %p204 = pneg %p110
        %p205 = pneg %p107
        %s206 = sand.u32 %s97, 1
        %s207 = scalar_lea.sflag [#allocation4], %s206
        %s208 = sand.u32 %s97, 1
        %s209 = smul.addr %s208, 8
        %s210 = scalar_lea.vmem [#allocation8], %s209
        %v211 = vld [vmem:[%s180] sm:$0xff]
        %v212 = vrot.slane %v211, 4
        %v213 = vadd.f32 %v211, %v212
        %v214 = vrot.slane %v213, 2
        %v215 = vadd.f32 %v213, %v214
        %v216 = vrot.slane %v215, 1
        %v217 = vadd.f32 %v215, %v216
        %218 = vadd.xlane.f32.xlu0 %v217
        %v219 = vpop.xlane.xlu0 %218
        %v220 = vmul.f32 %v211, %v211
        %v221 = vrot.slane %v220, 4
        %v222 = vadd.f32 %v220, %v221
        %v223 = vrot.slane %v222, 2
        %v224 = vadd.f32 %v222, %v223
        %v225 = vrot.slane %v224, 1
        %v226 = vadd.f32 %v224, %v225
        %227 = vadd.xlane.f32.xlu0 %v226
        %v228 = vpop.xlane.xlu0 %227
        %v229 = vmul.f32 %v219, 0.0009765625
        %v230 = vmul.f32 %v229, 1024.0
        %v231 = vmul.f32 %v230, %v229
        %v232 = vsub.f32 %v228, %v231
        %v233 = vmul.f32 %v232, 0.0009775171
        %v234 = vmax.f32 %v233, 0.0
        %v235 = vrsqrt.pop %v234
        %v236 = vmul.f32 %v234, %v235
        %vm237 = vcmp.eq.f32.partialorder %v234, inf
        %v238 = vsel %vm237, %v234, %v236
        %vm239 = vcmp.eq.f32.partialorder %v234, 0.0
        %v240 = vand.u32 %v234, 2147483648
        %v241 = vsel %vm239, %v240, %v238
        %v242 = vadd.f32 %v241, 1e-05
        %v243 = vrcp.pop %v242
        %v244 = vmul.f32 1.0, %v243
        %v245 = vld [vmem:[#allocation5] sm:$0xff]
        %v246 = vld [vmem:[#allocation7] sm:$0xff]
        %v247 = vsub.f32 %v211, %v229
        %v248 = vmul.f32 %v247, %v244
        %v249 = vmul.f32 %v248, %v245
        %v250 = vadd.f32 %v249, %v246
        %251 = vst [vmem:[%s210] sm:$0xff] %v250
        %s252 = sand.u32 %s97, 1
        %s253 = scalar_lea.sflag [#allocation4], %s252
        %s254 = sand.u32 %s97, 1
        %s255 = smul.addr %s254, 8
        %s256 = scalar_lea.vmem [#allocation8], %s255
        // Predicated region
        $region45: #{tpu_custom_call.1} parent=31 // pred_check
          %p257 = pneg %p107
        $region46: #{tpu_custom_call.1} parent=31 // pred_check_branch
          %259 = sbr.rel (%p257) target = $region48
        $region47: #{tpu_custom_call.1} parent=31 // pred_region
          %s261 = ssub.s32 128, 128
          %262 = vsyncadd %s253, %s261
          %s263 = smul.addr %s21, 128
          %s264 = scalar_lea.hbm %s3, %s263
          %s266 = sshll.u32 %s256, 4
          %s267 = int_to_ptr.vmem [resolvable:$true] %s266
          %269 = dma.vmem_to_hbm [thread:$0]  %s267, 128, %s264, %s253
        $region48: #{tpu_custom_call.1} parent=31 // pred_fallthru
          _
      $region32: #{tpu_custom_call.1} parent=5 // pred_fallthru
        _
      %p270 = scmp.le.s32.totalorder 2, %s16
      // Predicated region
      $region49: #{tpu_custom_call.1} parent=5 // pred_check
        %p271 = pneg %p270
      $region50: #{tpu_custom_call.1} parent=5 // pred_check_branch
        %273 = sbr.rel (%p271) target = $region52
      $region51: #{tpu_custom_call.1} parent=5 // pred_region
        %s274 = ssub.s32 %s16, 2
        // Predicated region
        $region53: #{tpu_custom_call.1} parent=51 // pred_check
          %p275 = pneg %p113
        $region54: #{tpu_custom_call.1} parent=51 // pred_check_branch
          %277 = sbr.rel (%p275) target = $region56
        $region55: #{tpu_custom_call.1} parent=51 // pred_region
          %s278 = sand.u32 %s98, 1
          %s279 = scalar_lea.sflag [#allocation4], %s278
          %s280 = sand.u32 %s98, 1
          %s281 = smul.addr %s280, 8
          %s282 = scalar_lea.vmem [#allocation8], %s281
          %283 = dma.done %s279, 128
        $region56: #{tpu_custom_call.1} parent=51 // pred_fallthru
          _
      $region52: #{tpu_custom_call.1} parent=5 // pred_fallthru
        _
    $region6: #{tpu_custom_call.1} parent=1 // loop_footer
      %s20 = sadd.s32 1, %s16
    $region7: #{tpu_custom_call.1} parent=1 // loop_footer_branch
      %15 = sbr.rel target = $region3
    $region8: #{tpu_custom_call.1} parent=1 // loop_exit
      _
    %284 = vsyncpa [#allocation3], 1
    %s285 = scalar_lea.sflag [#allocation3], 1
    %286 = vsyncpa %s285, 1
    %287 = vsyncpa [#allocation6], 1
    %288 = vsyncpa [#allocation4], 1
    %s289 = scalar_lea.sflag [#allocation4], 1
    %290 = vsyncpa %s289, 1

</llo_original>
